<compile_context>
chip_gen: v6e
topology: v6e:2x2x1
jax: 0.10.0
libtpu: 0.0.40
codegen_flags: <defaults>
</compile_context>

<pallas_src>
import jax
import jax.numpy as jnp
from jax.experimental import pallas as pl
from jax.experimental.pallas import tpu as pltpu

# ---- module hyper-parameters (ReSConv2d(input_channel, output_channel, filter_size)) ----
INPUT_CHANNEL = 4
OUTPUT_CHANNEL = 8
FILTER_SIZE = 3     # kernel_size -> (3, 3), stride=1, padding=0, dilation=1, groups=1, bias=True

ROW_TILE = 512            # row tile for the large-problem path
SMALL_ROWS_LIMIT = 4096   # below this, keep the whole problem resident (no grid)


def _im2col_matmul_kernel(p_ref, w_ref, b_ref, o_ref):
    """o = p @ w + b.

    p_ref: (rows_or_tile, K)  VMEM   K = C*KH*KW
    w_ref: (K, O)             VMEM
    b_ref: (1, O)             VMEM
    o_ref: (rows_or_tile, O)  VMEM
    """
    acc = jnp.dot(p_ref[...], w_ref[...], preferred_element_type=jnp.float32)
    o_ref[...] = (acc + b_ref[...]).astype(o_ref.dtype)


@jax.jit
def res_conv2d_forward(x_nchw, weight_ockk, bias_o):
    """Equivalent of ReSConv2d.forward / F.conv2d(x, w, b) with default args."""
    n, c, h, w = x_nchw.shape
    o, _, kh, kw = weight_ockk.shape
    oh, ow = h - kh + 1, w - kw + 1
    rows = n * oh * ow
    k_dim = c * kh * kw

    # ---- im2col in ONE op: (N, OH, OW, C*KH*KW), feature order (c, kh, kw) ----
    patches = jax.lax.conv_general_dilated_patches(
        x_nchw, (kh, kw), (1, 1), "VALID",
        dimension_numbers=("NCHW", "OIHW", "NHWC"))
    patches = patches.reshape(rows, k_dim)

    # weight (O, C, KH, KW) -> (O, K) -> (K, O); same (c, kh, kw) feature order.
    w_mat = weight_ockk.reshape(o, k_dim).T          # (K, O)
    b_mat = bias_o.reshape(1, o)                     # (1, O)

    cost = pl.CostEstimate(
        flops=2 * rows * k_dim * o,
        transcendentals=0,
        bytes_accessed=4 * (rows * k_dim + k_dim * o + o + rows * o))

    if rows <= SMALL_ROWS_LIMIT:
        # ---- whole problem resident in VMEM, single invocation, no pipeline ----
        vmem_spec = pl.BlockSpec(memory_space=pltpu.MemorySpace.VMEM)
        out_flat = pl.pallas_call(
            _im2col_matmul_kernel,
            out_shape=jax.ShapeDtypeStruct((rows, o), x_nchw.dtype),
            in_specs=[vmem_spec, vmem_spec, vmem_spec],
            out_specs=vmem_spec,
            cost_estimate=cost,
        )(patches, w_mat, b_mat)
    else:
        # ---- row-tiled path for non-toy sizes: shards across TCs (v7x) and
        #      keeps per-step VMEM well under v5e's scoped default. ----
        rows_pad = pl.cdiv(rows, ROW_TILE) * ROW_TILE
        patches_p = jnp.pad(patches, ((0, rows_pad - rows), (0, 0)))
        out_padded = pl.pallas_call(
            _im2col_matmul_kernel,
            out_shape=jax.ShapeDtypeStruct((rows_pad, o), x_nchw.dtype),
            grid=(rows_pad // ROW_TILE,),
            in_specs=[
                pl.BlockSpec((ROW_TILE, k_dim), lambda i: (i, 0)),
                pl.BlockSpec((k_dim, o), lambda i: (0, 0)),
                pl.BlockSpec((1, o), lambda i: (0, 0)),
            ],
            out_specs=pl.BlockSpec((ROW_TILE, o), lambda i: (i, 0)),
            compiler_params=pltpu.CompilerParams(
                dimension_semantics=("parallel",),
                vmem_limit_bytes=64 << 20),
            cost_estimate=cost,
        )(patches_p, w_mat, b_mat)
        out_flat = out_padded[:rows]

    # restore NCHW
    out_nhwc = out_flat.reshape(n, oh, ow, o)
    return jnp.transpose(out_nhwc, (0, 3, 1, 2))


def init_params(key):
    """Deterministic init matching ReSpropConvNd.reset_parameters:
    uniform(-stdv, stdv) with stdv = 1/sqrt(in_channels * kh * kw)."""
    kh = kw = FILTER_SIZE
    n_fan = INPUT_CHANNEL * kh * kw
    stdv = 1.0 / (n_fan ** 0.5)
    kw_key, kb_key = jax.random.split(key)
    weight = jax.random.uniform(
        kw_key, (OUTPUT_CHANNEL, INPUT_CHANNEL, kh, kw),
        minval=-stdv, maxval=stdv, dtype=jnp.float32)
    bias = jax.random.uniform(
        kb_key, (OUTPUT_CHANNEL,),
        minval=-stdv, maxval=stdv, dtype=jnp.float32)
    return weight, bias


if __name__ == "__main__":
    key = jax.random.PRNGKey(0)
    k_x, k_p = jax.random.split(key)

    # small NCHW input consistent with the module
    x = jax.random.normal(k_x, (2, INPUT_CHANNEL, 16, 16), dtype=jnp.float32)
    weight, bias = init_params(k_p)

    out = res_conv2d_forward(x, weight, bias)
    out = jax.block_until_ready(out)

    # sanity check against XLA's conv (plain JAX reference)
    ref = jax.lax.conv_general_dilated(
        x, weight, window_strides=(1, 1), padding="VALID",
        dimension_numbers=("NCHW", "OIHW", "NCHW"))
    ref = ref + bias[None, :, None, None]
    assert out.shape == (2, OUTPUT_CHANNEL, 14, 14), out.shape
    assert jnp.allclose(out, ref, atol=1e-4, rtol=1e-4), (
        float(jnp.max(jnp.abs(out - ref))))

    print("KERNEL_OK")
</pallas_src>

<mosaic_0001>
module attributes {stable_mosaic.version = 11 : i64} {
  func.func @_im2col_matmul_kernel(%arg0: memref<392x36xf32, #tpu.memory_space<vmem>>, %arg1: memref<36x8xf32, #tpu.memory_space<vmem>>, %arg2: memref<1x8xf32, #tpu.memory_space<vmem>>, %arg3: memref<392x8xf32, #tpu.memory_space<vmem>>) attributes {dimension_semantics = [], scalar_prefetch = 0 : i64, scratch_operands = 0 : i64, tpu.core_type = #tpu.core_type<tc>} {
    %c0 = arith.constant 0 : index
    %c0_0 = arith.constant 0 : index
    %0 = vector.load %arg0[%c0, %c0_0] : memref<392x36xf32, #tpu.memory_space<vmem>>, vector<392x36xf32>
    %c0_1 = arith.constant 0 : index
    %c0_2 = arith.constant 0 : index
    %1 = vector.load %arg1[%c0_1, %c0_2] : memref<36x8xf32, #tpu.memory_space<vmem>>, vector<36x8xf32>
    %cst = arith.constant dense<0.000000e+00> : vector<392x8xf32>
    %2 = tpu.matmul %0, %1, %cst {dimension_numbers = #tpu.dot_dimension_numbers<[1], [0], [0], [1], [0, 0, 1, 1], [], []>} : vector<392x36xf32>, vector<36x8xf32>, vector<392x8xf32> -> vector<392x8xf32>
    %c0_3 = arith.constant 0 : index
    %c0_4 = arith.constant 0 : index
    %3 = vector.load %arg2[%c0_3, %c0_4] : memref<1x8xf32, #tpu.memory_space<vmem>>, vector<1x8xf32>
    %4 = vector.broadcast %3 : vector<1x8xf32> to vector<392x8xf32>
    %5 = arith.addf %2, %4 : vector<392x8xf32>
    %c0_5 = arith.constant 0 : index
    %c0_6 = arith.constant 0 : index
    %6 = vector.load %arg3[%c0_5, %c0_6] : memref<392x8xf32, #tpu.memory_space<vmem>>, vector<392x8xf32>
    tpu.vector_store %arg3[%c0_5, %c0_6], %5 {strides = array<i32>} : memref<392x8xf32, #tpu.memory_space<vmem>>, vector<392x8xf32>,
    return
  }
}

</mosaic_0001>

<llo_original>
// kernel: res_conv2d_forward.1
$region0: #{res_conv2d_forward.1}
  #allocation0 [shape = 'u32[]', space=smem, size = 0x4, offset = 0x4, fixed_abs, tag = 'smem constant byte address 0x4 - core index']
  #allocation1 [shape = 'u32[144,128]{1,0:T(1,128)}', space=vmem, size = 0x12000, scoped, tag = 'internal scratch']
  %s0 = inlined_call_operand.vmem [shape: f32[392,36], index: 0, kind: input, shape index: {}]
  %s1 = inlined_call_operand.vmem [shape: f32[36,8], index: 1, kind: input, shape index: {}]
  %s2 = inlined_call_operand.vmem [shape: f32[1,8], index: 2, kind: input, shape index: {}]
  %s3 = inlined_call_operand.vmem [shape: f32[392,8], index: 3, kind: output, shape index: {}]
  %s4 = sld [smem:[#allocation0]]
  $region22: #{res_conv2d_forward.1} parent=0
    _
  %s6 = ssub.s32 1, %s4
  %s7 = scalar_select 0, %s6, %s4
  // Predicated region
  $region2: #{res_conv2d_forward.1} parent=0 // pred_check
    _
  $region3: #{res_conv2d_forward.1} parent=0 // pred_check_branch
    %9 = sbr.rel (0) target = $region5
  $region4: #{res_conv2d_forward.1} parent=0 // pred_region
    _
  $region5: #{res_conv2d_forward.1} parent=0 // pred_fallthru
    _
  // Predicated region
  $region6: #{res_conv2d_forward.1} parent=0 // pred_check
    _
  $region7: #{res_conv2d_forward.1} parent=0 // pred_check_branch
    %11 = sbr.rel (0) target = $region9
  $region8: #{res_conv2d_forward.1} parent=0 // pred_region
    _
  $region9: #{res_conv2d_forward.1} parent=0 // pred_fallthru
    _
  // Predicated region
  $region10: #{res_conv2d_forward.1} parent=0 // pred_check
    _
  $region11: #{res_conv2d_forward.1} parent=0 // pred_check_branch
    %13 = sbr.rel (0) target = $region13
  $region12: #{res_conv2d_forward.1} parent=0 // pred_region
    _
  $region13: #{res_conv2d_forward.1} parent=0 // pred_fallthru
    _
  %v14 = vld [vmem:[%s0] sm:$0xff]
  %v15 = vld [vmem:[%s0 + $0x8] sm:$0xff]
  %v16 = vld [vmem:[%s0 + $0x10] sm:$0xff]
  %v17 = vld [vmem:[%s0 + $0x18] sm:$0xff]
  %v18 = vld [vmem:[%s0 + $0x20] sm:$0xff]
  %v19 = vld [vmem:[%s0 + $0x28] sm:$0xff]
  %v20 = vld [vmem:[%s0 + $0x30] sm:$0xff]
  %v21 = vld [vmem:[%s0 + $0x38] sm:$0xff]
  %v22 = vld [vmem:[%s0 + $0x40] sm:$0xff]
  %v23 = vld [vmem:[%s0 + $0x48] sm:$0xff]
  %v24 = vld [vmem:[%s0 + $0x50] sm:$0xff]
  %v25 = vld [vmem:[%s0 + $0x58] sm:$0xff]
  %v26 = vld [vmem:[%s0 + $0x60] sm:$0xff]
  %v27 = vld [vmem:[%s0 + $0x68] sm:$0xff]
  %v28 = vld [vmem:[%s0 + $0x70] sm:$0xff]
  %v29 = vld [vmem:[%s0 + $0x78] sm:$0xff]
  %v30 = vld [vmem:[%s0 + $0x80] sm:$0xff]
  %v31 = vld [vmem:[%s0 + $0x88] sm:$0xff]
  %v32 = vld [vmem:[%s0 + $0x90] sm:$0xff]
  %v33 = vld [vmem:[%s0 + $0x98] sm:$0xff]
  %v34 = vld [vmem:[%s0 + $0xa0] sm:$0xff]
  %v35 = vld [vmem:[%s0 + $0xa8] sm:$0xff]
  %v36 = vld [vmem:[%s0 + $0xb0] sm:$0xff]
  %v37 = vld [vmem:[%s0 + $0xb8] sm:$0xff]
  %v38 = vld [vmem:[%s0 + $0xc0] sm:$0xff]
  %v39 = vld [vmem:[%s0 + $0xc8] sm:$0xff]
  %v40 = vld [vmem:[%s0 + $0xd0] sm:$0xff]
  %v41 = vld [vmem:[%s0 + $0xd8] sm:$0xff]
  %v42 = vld [vmem:[%s0 + $0xe0] sm:$0xff]
  %v43 = vld [vmem:[%s0 + $0xe8] sm:$0xff]
  %v44 = vld [vmem:[%s0 + $0xf0] sm:$0xff]
  %v45 = vld [vmem:[%s0 + $0xf8] sm:$0xff]
  %v46 = vld [vmem:[%s0 + $0x100] sm:$0xff]
  %v47 = vld [vmem:[%s0 + $0x108] sm:$0xff]
  %v48 = vld [vmem:[%s0 + $0x110] sm:$0xff]
  %v49 = vld [vmem:[%s0 + $0x118] sm:$0xff]
  %v50 = vld [vmem:[%s0 + $0x120] sm:$0xff]
  %v51 = vld [vmem:[%s0 + $0x128] sm:$0xff]
  %v52 = vld [vmem:[%s0 + $0x130] sm:$0xff]
  %v53 = vld [vmem:[%s0 + $0x138] sm:$0xff]
  %v54 = vld [vmem:[%s0 + $0x140] sm:$0xff]
  %v55 = vld [vmem:[%s0 + $0x148] sm:$0xff]
  %v56 = vld [vmem:[%s0 + $0x150] sm:$0xff]
  %v57 = vld [vmem:[%s0 + $0x158] sm:$0xff]
  %v58 = vld [vmem:[%s0 + $0x160] sm:$0xff]
  %v59 = vld [vmem:[%s0 + $0x168] sm:$0xff]
  %v60 = vld [vmem:[%s0 + $0x170] sm:$0xff]
  %v61 = vld [vmem:[%s0 + $0x178] sm:$0xff]
  %v62 = vld [vmem:[%s0 + $0x180] sm:$0xff]
  %v63 = vld [vmem:[%s1] sm:$0xff]
  %v64 = vld [vmem:[%s1 + $0x8] sm:$0xff]
  %v65 = vld [vmem:[%s1 + $0x10] sm:$0xff]
  %v66 = vld [vmem:[%s1 + $0x18] sm:$0xff]
  %v67 = vld [vmem:[%s1 + $0x20] sm:$0xf]
  %v68 = vld [vmem:[%s2] sm:$0x1]
  %v70 = vlaneseq
  %v71 = vshrl.u32 %v70, 7
  %v72 = vsub.s32 0, %v71
  %v73 = vrot.slane %v68, %v72
  %vm75 = vcmask 293888
  %v77 = vsel %vm75, %v14, 0
  %v80 = vsel %vm75, %v15, 0
  %v83 = vsel %vm75, %v16, 0
  %v86 = vsel %vm75, %v17, 0
  %v89 = vsel %vm75, %v18, 0
  %v92 = vsel %vm75, %v19, 0
  %v95 = vsel %vm75, %v20, 0
  %v98 = vsel %vm75, %v21, 0
  %v101 = vsel %vm75, %v22, 0
  %v104 = vsel %vm75, %v23, 0
  %v107 = vsel %vm75, %v24, 0
  %v110 = vsel %vm75, %v25, 0
  %v113 = vsel %vm75, %v26, 0
  %v116 = vsel %vm75, %v27, 0
  %v119 = vsel %vm75, %v28, 0
  %v122 = vsel %vm75, %v29, 0
  %v125 = vsel %vm75, %v30, 0
  %v128 = vsel %vm75, %v31, 0
  %v131 = vsel %vm75, %v32, 0
  %v134 = vsel %vm75, %v33, 0
  %v137 = vsel %vm75, %v34, 0
  %v140 = vsel %vm75, %v35, 0
  %v143 = vsel %vm75, %v36, 0
  %v146 = vsel %vm75, %v37, 0
  %v149 = vsel %vm75, %v38, 0
  %v152 = vsel %vm75, %v39, 0
  %v155 = vsel %vm75, %v40, 0
  %v158 = vsel %vm75, %v41, 0
  %v161 = vsel %vm75, %v42, 0
  %v164 = vsel %vm75, %v43, 0
  %v167 = vsel %vm75, %v44, 0
  %v170 = vsel %vm75, %v45, 0
  %v173 = vsel %vm75, %v46, 0
  %v176 = vsel %vm75, %v47, 0
  %v179 = vsel %vm75, %v48, 0
  %v182 = vsel %vm75, %v49, 0
  %v185 = vsel %vm75, %v50, 0
  %v188 = vsel %vm75, %v51, 0
  %v191 = vsel %vm75, %v52, 0
  %v194 = vsel %vm75, %v53, 0
  %v197 = vsel %vm75, %v54, 0
  %v200 = vsel %vm75, %v55, 0
  %v203 = vsel %vm75, %v56, 0
  %v206 = vsel %vm75, %v57, 0
  %v209 = vsel %vm75, %v58, 0
  %v212 = vsel %vm75, %v59, 0
  %v215 = vsel %vm75, %v60, 0
  %v218 = vsel %vm75, %v61, 0
  %v221 = vsel %vm75, %v62, 0
  %vm223 = vcmask 1043456
  %v225 = vsel %vm223, %v67, 0
  %227 = vmatprep.subr.mxu0 0.0
  %228 = vmatpush1.msra.mxu0 0.0
  %229 = vmatprep.subr.mxu0 0.0
  %230 = vmatpush1.msra.mxu0 0.0
  %231 = vmatprep.subr.mxu0 0.0
  %232 = vmatpush1.msra.mxu0 0.0
  %233 = vmatprep.subr.mxu0 0.0
  %234 = vmatpush1.msra.mxu0 0.0
  %235 = vmatprep.subr.mxu0 0.0
  %236 = vmatpush1.msra.mxu0 0.0
  %237 = vmatprep.subr.mxu0 0.0
  %238 = vmatpush1.msra.mxu0 0.0
  %239 = vmatprep.subr.mxu0 0.0
  %240 = vmatpush1.msra.mxu0 0.0
  %241 = vmatprep.subr.mxu0 0.0
  %242 = vmatpush1.msra.mxu0 0.0
  %243 = vmatprep.subr.mxu0 0.0
  %244 = vmatpush1.msra.mxu0 0.0
  %245 = vmatprep.subr.mxu0 0.0
  %246 = vmatpush1.msra.mxu0 0.0
  %247 = vmatprep.subr.mxu0 0.0
  %248 = vmatpush1.msra.mxu0 0.0
  %249 = vmatprep.subr.mxu0 0.0
  %250 = vmatpush1.msra.mxu0 %v225
  %251 = vmatprep.subr.mxu0 0.0
  %252 = vmatpush1.msra.mxu0 %v66
  %253 = vmatprep.subr.mxu0 0.0
  %254 = vmatpush1.msra.mxu0 %v65
  %255 = vmatprep.subr.mxu0 0.0
  %256 = vmatpush1.msra.mxu0 %v64
  %257 = vmatprep.subr.mxu0 0.0
  %258 = vmatpush1.msra.mxu0 %v63
  %259 = vmatprep.subr.mxu0 0.0
  %260 = vmatpush2.msra.mxu0 0.0
  %261 = vmatprep.subr.mxu0 0.0
  %262 = vmatpush2.msra.mxu0 0.0
  %263 = vmatprep.subr.mxu0 0.0
  %264 = vmatpush2.msra.mxu0 0.0
  %265 = vmatprep.subr.mxu0 0.0
  %266 = vmatpush2.msra.mxu0 0.0
  %267 = vmatprep.subr.mxu0 0.0
  %268 = vmatpush2.msra.mxu0 0.0
  %269 = vmatprep.subr.mxu0 0.0
  %270 = vmatpush2.msra.mxu0 0.0
  %271 = vmatprep.subr.mxu0 0.0
  %272 = vmatpush2.msra.mxu0 0.0
  %273 = vmatprep.subr.mxu0 0.0
  %274 = vmatpush2.msra.mxu0 0.0
  %275 = vmatprep.subr.mxu0 0.0
  %276 = vmatpush2.msra.mxu0 0.0
  %277 = vmatprep.subr.mxu0 0.0
  %278 = vmatpush2.msra.mxu0 0.0
  %279 = vmatprep.subr.mxu0 0.0
  %280 = vmatpush2.msra.mxu0 0.0
  %281 = vmatprep.subr.mxu0 0.0
  %282 = vmatpush2.msra.mxu0 0.0
  %283 = vmatprep.subr.mxu0 0.0
  %284 = vmatpush2.msra.mxu0 0.0
  %285 = vmatprep.subr.mxu0 0.0
  %286 = vmatpush2.msra.mxu0 0.0
  %287 = vmatprep.subr.mxu0 0.0
  %288 = vmatpush2.msra.mxu0 0.0
  %289 = vmatprep.subr.mxu0 0.0
  %290 = vmatpush2.msra.mxu0 0.0
  %291 = vmatprep.mubr.f32.mxu0 0.0
  %292 = vmatmul.mubr.f32.gmra.mxu0 %v77
  %v293 = vpop.f32.mrf.mxu0
  %v294 = vadd.f32 %v73, %v293
  %v295 = vpop.f32.mrf.mxu0
  %296 = vmatprep.mubr.f32.mxu0 0.0
  %297 = vmatmul.mubr.f32.gmra.mxu0 %v80
  %v298 = vpop.f32.mrf.mxu0
  %v299 = vadd.f32 %v73, %v298
  %v300 = vpop.f32.mrf.mxu0
  %301 = vmatprep.mubr.f32.mxu0 0.0
  %302 = vmatmul.mubr.f32.gmra.mxu0 %v83
  %v303 = vpop.f32.mrf.mxu0
  %v304 = vadd.f32 %v73, %v303
  %v305 = vpop.f32.mrf.mxu0
  %306 = vmatprep.mubr.f32.mxu0 0.0
  %307 = vmatmul.mubr.f32.gmra.mxu0 %v86
  %v308 = vpop.f32.mrf.mxu0
  %v309 = vadd.f32 %v73, %v308
  %v310 = vpop.f32.mrf.mxu0
  %311 = vmatprep.mubr.f32.mxu0 0.0
  %312 = vmatmul.mubr.f32.gmra.mxu0 %v89
  %v313 = vpop.f32.mrf.mxu0
  %v314 = vadd.f32 %v73, %v313
  %v315 = vpop.f32.mrf.mxu0
  %316 = vmatprep.mubr.f32.mxu0 0.0
  %317 = vmatmul.mubr.f32.gmra.mxu0 %v92
  %v318 = vpop.f32.mrf.mxu0
  %v319 = vadd.f32 %v73, %v318
  %v320 = vpop.f32.mrf.mxu0
  %321 = vmatprep.mubr.f32.mxu0 0.0
  %322 = vmatmul.mubr.f32.gmra.mxu0 %v95
  %v323 = vpop.f32.mrf.mxu0
  %v324 = vadd.f32 %v73, %v323
  %v325 = vpop.f32.mrf.mxu0
  %326 = vmatprep.mubr.f32.mxu0 0.0
  %327 = vmatmul.mubr.f32.gmra.mxu0 %v98
  %v328 = vpop.f32.mrf.mxu0
  %v329 = vadd.f32 %v73, %v328
  %v330 = vpop.f32.mrf.mxu0
  %331 = vmatprep.mubr.f32.mxu0 0.0
  %332 = vmatmul.mubr.f32.gmra.mxu0 %v101
  %v333 = vpop.f32.mrf.mxu0
  %v334 = vadd.f32 %v73, %v333
  %v335 = vpop.f32.mrf.mxu0
  %336 = vmatprep.mubr.f32.mxu0 0.0
  %337 = vmatmul.mubr.f32.gmra.mxu0 %v104
  %v338 = vpop.f32.mrf.mxu0
  %v339 = vadd.f32 %v73, %v338
  %v340 = vpop.f32.mrf.mxu0
  %341 = vmatprep.mubr.f32.mxu0 0.0
  %342 = vmatmul.mubr.f32.gmra.mxu0 %v107
  %v343 = vpop.f32.mrf.mxu0
  %v344 = vadd.f32 %v73, %v343
  %v345 = vpop.f32.mrf.mxu0
  %346 = vmatprep.mubr.f32.mxu0 0.0
  %347 = vmatmul.mubr.f32.gmra.mxu0 %v110
  %v348 = vpop.f32.mrf.mxu0
  %v349 = vadd.f32 %v73, %v348
  %v350 = vpop.f32.mrf.mxu0
  %351 = vmatprep.mubr.f32.mxu0 0.0
  %352 = vmatmul.mubr.f32.gmra.mxu0 %v113
  %v353 = vpop.f32.mrf.mxu0
  %v354 = vadd.f32 %v73, %v353
  %v355 = vpop.f32.mrf.mxu0
  %356 = vmatprep.mubr.f32.mxu0 0.0
  %357 = vmatmul.mubr.f32.gmra.mxu0 %v116
  %v358 = vpop.f32.mrf.mxu0
  %v359 = vadd.f32 %v73, %v358
  %v360 = vpop.f32.mrf.mxu0
  %361 = vmatprep.mubr.f32.mxu0 0.0
  %362 = vmatmul.mubr.f32.gmra.mxu0 %v119
  %v363 = vpop.f32.mrf.mxu0
  %v364 = vadd.f32 %v73, %v363
  %v365 = vpop.f32.mrf.mxu0
  %366 = vmatprep.mubr.f32.mxu0 0.0
  %367 = vmatmul.mubr.f32.gmra.mxu0 %v122
  %v368 = vpop.f32.mrf.mxu0
  %v369 = vadd.f32 %v73, %v368
  %v370 = vpop.f32.mrf.mxu0
  %371 = vmatprep.mubr.f32.mxu0 0.0
  %372 = vmatmul.mubr.f32.gmra.mxu0 %v125
  %v373 = vpop.f32.mrf.mxu0
  %v374 = vadd.f32 %v73, %v373
  %v375 = vpop.f32.mrf.mxu0
  %376 = vmatprep.mubr.f32.mxu0 0.0
  %377 = vmatmul.mubr.f32.gmra.mxu0 %v128
  %v378 = vpop.f32.mrf.mxu0
  %v379 = vadd.f32 %v73, %v378
  %v380 = vpop.f32.mrf.mxu0
  %381 = vmatprep.mubr.f32.mxu0 0.0
  %382 = vmatmul.mubr.f32.gmra.mxu0 %v131
  %v383 = vpop.f32.mrf.mxu0
  %v384 = vadd.f32 %v73, %v383
  %v385 = vpop.f32.mrf.mxu0
  %386 = vmatprep.mubr.f32.mxu0 0.0
  %387 = vmatmul.mubr.f32.gmra.mxu0 %v134
  %v388 = vpop.f32.mrf.mxu0
  %v389 = vadd.f32 %v73, %v388
  %v390 = vpop.f32.mrf.mxu0
  %391 = vmatprep.mubr.f32.mxu0 0.0
  %392 = vmatmul.mubr.f32.gmra.mxu0 %v137
  %v393 = vpop.f32.mrf.mxu0
  %v394 = vadd.f32 %v73, %v393
  %v395 = vpop.f32.mrf.mxu0
  %396 = vmatprep.mubr.f32.mxu0 0.0
  %397 = vmatmul.mubr.f32.gmra.mxu0 %v140
  %v398 = vpop.f32.mrf.mxu0
  %v399 = vadd.f32 %v73, %v398
  %v400 = vpop.f32.mrf.mxu0
  %401 = vmatprep.mubr.f32.mxu0 0.0
  %402 = vmatmul.mubr.f32.gmra.mxu0 %v143
  %v403 = vpop.f32.mrf.mxu0
  %v404 = vadd.f32 %v73, %v403
  %v405 = vpop.f32.mrf.mxu0
  %406 = vmatprep.mubr.f32.mxu0 0.0
  %407 = vmatmul.mubr.f32.gmra.mxu0 %v146
  %v408 = vpop.f32.mrf.mxu0
  %v409 = vadd.f32 %v73, %v408
  %v410 = vpop.f32.mrf.mxu0
  %411 = vmatprep.mubr.f32.mxu0 0.0
  %412 = vmatmul.mubr.f32.gmra.mxu0 %v149
  %v413 = vpop.f32.mrf.mxu0
  %v414 = vadd.f32 %v73, %v413
  %v415 = vpop.f32.mrf.mxu0
  %416 = vmatprep.mubr.f32.mxu0 0.0
  %417 = vmatmul.mubr.f32.gmra.mxu0 %v152
  %v418 = vpop.f32.mrf.mxu0
  %v419 = vadd.f32 %v73, %v418
  %v420 = vpop.f32.mrf.mxu0
  %421 = vmatprep.mubr.f32.mxu0 0.0
  %422 = vmatmul.mubr.f32.gmra.mxu0 %v155
  %v423 = vpop.f32.mrf.mxu0
  %v424 = vadd.f32 %v73, %v423
  %v425 = vpop.f32.mrf.mxu0
  %426 = vmatprep.mubr.f32.mxu0 0.0
  %427 = vmatmul.mubr.f32.gmra.mxu0 %v158
  %v428 = vpop.f32.mrf.mxu0
  %v429 = vadd.f32 %v73, %v428
  %v430 = vpop.f32.mrf.mxu0
  %431 = vmatprep.mubr.f32.mxu0 0.0
  %432 = vmatmul.mubr.f32.gmra.mxu0 %v161
  %v433 = vpop.f32.mrf.mxu0
  %v434 = vadd.f32 %v73, %v433
  %v435 = vpop.f32.mrf.mxu0
  %436 = vmatprep.mubr.f32.mxu0 0.0
  %437 = vmatmul.mubr.f32.gmra.mxu0 %v164
  %v438 = vpop.f32.mrf.mxu0
  %v439 = vadd.f32 %v73, %v438
  %v440 = vpop.f32.mrf.mxu0
  %441 = vmatprep.mubr.f32.mxu0 0.0
  %442 = vmatmul.mubr.f32.gmra.mxu0 %v167
  %v443 = vpop.f32.mrf.mxu0
  %v444 = vadd.f32 %v73, %v443
  %v445 = vpop.f32.mrf.mxu0
  %446 = vmatprep.mubr.f32.mxu0 0.0
  %447 = vmatmul.mubr.f32.gmra.mxu0 %v170
  %v448 = vpop.f32.mrf.mxu0
  %v449 = vadd.f32 %v73, %v448
  %v450 = vpop.f32.mrf.mxu0
  %451 = vmatprep.mubr.f32.mxu0 0.0
  %452 = vmatmul.mubr.f32.gmra.mxu0 %v173
  %v453 = vpop.f32.mrf.mxu0
  %v454 = vadd.f32 %v73, %v453
  %v455 = vpop.f32.mrf.mxu0
  %456 = vmatprep.mubr.f32.mxu0 0.0
  %457 = vmatmul.mubr.f32.gmra.mxu0 %v176
  %v458 = vpop.f32.mrf.mxu0
  %v459 = vadd.f32 %v73, %v458
  %v460 = vpop.f32.mrf.mxu0
  %461 = vmatprep.mubr.f32.mxu0 0.0
  %462 = vmatmul.mubr.f32.gmra.mxu0 %v179
  %v463 = vpop.f32.mrf.mxu0
  %v464 = vadd.f32 %v73, %v463
  %v465 = vpop.f32.mrf.mxu0
  %466 = vmatprep.mubr.f32.mxu0 0.0
  %467 = vmatmul.mubr.f32.gmra.mxu0 %v182
  %v468 = vpop.f32.mrf.mxu0
  %v469 = vadd.f32 %v73, %v468
  %v470 = vpop.f32.mrf.mxu0
  %471 = vmatprep.mubr.f32.mxu0 0.0
  %472 = vmatmul.mubr.f32.gmra.mxu0 %v185
  %v473 = vpop.f32.mrf.mxu0
  %v474 = vadd.f32 %v73, %v473
  %v475 = vpop.f32.mrf.mxu0
  %476 = vmatprep.mubr.f32.mxu0 0.0
  %477 = vmatmul.mubr.f32.gmra.mxu0 %v188
  %v478 = vpop.f32.mrf.mxu0
  %v479 = vadd.f32 %v73, %v478
  %v480 = vpop.f32.mrf.mxu0
  %481 = vmatprep.mubr.f32.mxu0 0.0
  %482 = vmatmul.mubr.f32.gmra.mxu0 %v191
  %v483 = vpop.f32.mrf.mxu0
  %v484 = vadd.f32 %v73, %v483
  %v485 = vpop.f32.mrf.mxu0
  %486 = vmatprep.mubr.f32.mxu0 0.0
  %487 = vmatmul.mubr.f32.gmra.mxu0 %v194
  %v488 = vpop.f32.mrf.mxu0
  %v489 = vadd.f32 %v73, %v488
  %v490 = vpop.f32.mrf.mxu0
  %491 = vmatprep.mubr.f32.mxu0 0.0
  %492 = vmatmul.mubr.f32.gmra.mxu0 %v197
  %v493 = vpop.f32.mrf.mxu0
  %v494 = vadd.f32 %v73, %v493
  %v495 = vpop.f32.mrf.mxu0
  %496 = vmatprep.mubr.f32.mxu0 0.0
  %497 = vmatmul.mubr.f32.gmra.mxu0 %v200
  %v498 = vpop.f32.mrf.mxu0
  %v499 = vadd.f32 %v73, %v498
  %v500 = vpop.f32.mrf.mxu0
  %501 = vmatprep.mubr.f32.mxu0 0.0
  %502 = vmatmul.mubr.f32.gmra.mxu0 %v203
  %v503 = vpop.f32.mrf.mxu0
  %v504 = vadd.f32 %v73, %v503
  %v505 = vpop.f32.mrf.mxu0
  %506 = vmatprep.mubr.f32.mxu0 0.0
  %507 = vmatmul.mubr.f32.gmra.mxu0 %v206
  %v508 = vpop.f32.mrf.mxu0
  %v509 = vadd.f32 %v73, %v508
  %v510 = vpop.f32.mrf.mxu0
  %511 = vmatprep.mubr.f32.mxu0 0.0
  %512 = vmatmul.mubr.f32.gmra.mxu0 %v209
  %v513 = vpop.f32.mrf.mxu0
  %v514 = vadd.f32 %v73, %v513
  %v515 = vpop.f32.mrf.mxu0
  %516 = vmatprep.mubr.f32.mxu0 0.0
  %517 = vmatmul.mubr.f32.gmra.mxu0 %v212
  %v518 = vpop.f32.mrf.mxu0
  %v519 = vadd.f32 %v73, %v518
  %v520 = vpop.f32.mrf.mxu0
  %521 = vmatprep.mubr.f32.mxu0 0.0
  %522 = vmatmul.mubr.f32.gmra.mxu0 %v215
  %v523 = vpop.f32.mrf.mxu0
  %v524 = vadd.f32 %v73, %v523
  %v525 = vpop.f32.mrf.mxu0
  %526 = vmatprep.mubr.f32.mxu0 0.0
  %527 = vmatmul.mubr.f32.gmra.mxu0 %v218
  %v528 = vpop.f32.mrf.mxu0
  %v529 = vadd.f32 %v73, %v528
  %v530 = vpop.f32.mrf.mxu0
  %531 = vmatprep.mubr.f32.mxu0 0.0
  %532 = vmatmul.mubr.f32.gmra.mxu0 %v221
  %v533 = vpop.f32.mrf.mxu0
  %v534 = vadd.f32 %v73, %v533
  %v535 = vpop.f32.mrf.mxu0
  %536 = vdwg.mxu0
  %vm537 = vcmask 64512
  %538 = vst.msk [vmem:[%s3] sm:$0xff] %vm537, %v294
  %539 = vst.msk [vmem:[%s3 + $0x8] sm:$0xff] %vm537, %v299
  %540 = vst.msk [vmem:[%s3 + $0x10] sm:$0xff] %vm537, %v304
  %541 = vst.msk [vmem:[%s3 + $0x18] sm:$0xff] %vm537, %v309
  %542 = vst.msk [vmem:[%s3 + $0x20] sm:$0xff] %vm537, %v314
  %543 = vst.msk [vmem:[%s3 + $0x28] sm:$0xff] %vm537, %v319
  %544 = vst.msk [vmem:[%s3 + $0x30] sm:$0xff] %vm537, %v324
  %545 = vst.msk [vmem:[%s3 + $0x38] sm:$0xff] %vm537, %v329
  %546 = vst.msk [vmem:[%s3 + $0x40] sm:$0xff] %vm537, %v334
  %547 = vst.msk [vmem:[%s3 + $0x48] sm:$0xff] %vm537, %v339
  %548 = vst.msk [vmem:[%s3 + $0x50] sm:$0xff] %vm537, %v344
  %549 = vst.msk [vmem:[%s3 + $0x58] sm:$0xff] %vm537, %v349
  %550 = vst.msk [vmem:[%s3 + $0x60] sm:$0xff] %vm537, %v354
  %551 = vst.msk [vmem:[%s3 + $0x68] sm:$0xff] %vm537, %v359
  %552 = vst.msk [vmem:[%s3 + $0x70] sm:$0xff] %vm537, %v364
  %553 = vst.msk [vmem:[%s3 + $0x78] sm:$0xff] %vm537, %v369
  %554 = vst.msk [vmem:[%s3 + $0x80] sm:$0xff] %vm537, %v374
  %555 = vst.msk [vmem:[%s3 + $0x88] sm:$0xff] %vm537, %v379
  %556 = vst.msk [vmem:[%s3 + $0x90] sm:$0xff] %vm537, %v384
  %557 = vst.msk [vmem:[%s3 + $0x98] sm:$0xff] %vm537, %v389
  %558 = vst.msk [vmem:[%s3 + $0xa0] sm:$0xff] %vm537, %v394
  %559 = vst.msk [vmem:[%s3 + $0xa8] sm:$0xff] %vm537, %v399
  %560 = vst.msk [vmem:[%s3 + $0xb0] sm:$0xff] %vm537, %v404
  %561 = vst.msk [vmem:[%s3 + $0xb8] sm:$0xff] %vm537, %v409
  %562 = vst.msk [vmem:[%s3 + $0xc0] sm:$0xff] %vm537, %v414
  %563 = vst.msk [vmem:[%s3 + $0xc8] sm:$0xff] %vm537, %v419
  %564 = vst.msk [vmem:[%s3 + $0xd0] sm:$0xff] %vm537, %v424
  %565 = vst.msk [vmem:[%s3 + $0xd8] sm:$0xff] %vm537, %v429
  %566 = vst.msk [vmem:[%s3 + $0xe0] sm:$0xff] %vm537, %v434
  %567 = vst.msk [vmem:[%s3 + $0xe8] sm:$0xff] %vm537, %v439
  %568 = vst.msk [vmem:[%s3 + $0xf0] sm:$0xff] %vm537, %v444
  %569 = vst.msk [vmem:[%s3 + $0xf8] sm:$0xff] %vm537, %v449
  %570 = vst.msk [vmem:[%s3 + $0x100] sm:$0xff] %vm537, %v454
  %571 = vst.msk [vmem:[%s3 + $0x108] sm:$0xff] %vm537, %v459
  %572 = vst.msk [vmem:[%s3 + $0x110] sm:$0xff] %vm537, %v464
  %573 = vst.msk [vmem:[%s3 + $0x118] sm:$0xff] %vm537, %v469
  %574 = vst.msk [vmem:[%s3 + $0x120] sm:$0xff] %vm537, %v474
  %575 = vst.msk [vmem:[%s3 + $0x128] sm:$0xff] %vm537, %v479
  %576 = vst.msk [vmem:[%s3 + $0x130] sm:$0xff] %vm537, %v484
  %577 = vst.msk [vmem:[%s3 + $0x138] sm:$0xff] %vm537, %v489
  %578 = vst.msk [vmem:[%s3 + $0x140] sm:$0xff] %vm537, %v494
  %579 = vst.msk [vmem:[%s3 + $0x148] sm:$0xff] %vm537, %v499
  %580 = vst.msk [vmem:[%s3 + $0x150] sm:$0xff] %vm537, %v504
  %581 = vst.msk [vmem:[%s3 + $0x158] sm:$0xff] %vm537, %v509
  %582 = vst.msk [vmem:[%s3 + $0x160] sm:$0xff] %vm537, %v514
  %583 = vst.msk [vmem:[%s3 + $0x168] sm:$0xff] %vm537, %v519
  %584 = vst.msk [vmem:[%s3 + $0x170] sm:$0xff] %vm537, %v524
  %585 = vst.msk [vmem:[%s3 + $0x178] sm:$0xff] %vm537, %v529
  %586 = vst.msk [vmem:[%s3 + $0x180] sm:$0xff] %vm537, %v534
  // Predicated region
  $region14: #{res_conv2d_forward.1} parent=0 // pred_check
    _
  $region15: #{res_conv2d_forward.1} parent=0 // pred_check_branch
    %588 = sbr.rel (0) target = $region17
  $region16: #{res_conv2d_forward.1} parent=0 // pred_region
    _
  $region17: #{res_conv2d_forward.1} parent=0 // pred_fallthru
    _
  // Predicated region
  $region18: #{res_conv2d_forward.1} parent=0 // pred_check
    _
  $region19: #{res_conv2d_forward.1} parent=0 // pred_check_branch
    %590 = sbr.rel (0) target = $region21
  $region20: #{res_conv2d_forward.1} parent=0 // pred_region
    _
  $region21: #{res_conv2d_forward.1} parent=0 // pred_fallthru
    _

</llo_original>
